<compile_context>
chip_gen: v6e
topology: v6e:2x2x1
jax: 0.10.0
libtpu: 0.0.40
codegen_flags: <defaults>
</compile_context>

<pallas_src>
import jax
import jax.numpy as jnp
from jax.experimental import pallas as pl
from jax.experimental.pallas import tpu as pltpu

_MAX_TILE_N = 4096  # nodes (lanes) per grid step; ~1.2 MB of live VMEM


def _mlp_kernel(x_ref, w1_ref, b1_ref, w2_ref, b2_ref, w3_ref, b3_ref, o_ref):
    # x_ref: (5, T) with T nodes on the lane axis; weights stored (out, in).
    x = x_ref[...]
    h = jnp.dot(w1_ref[...], x, preferred_element_type=jnp.float32)   # (16, T)
    h = jnp.maximum(h + b1_ref[...], 0.0)
    h = jnp.dot(w2_ref[...], h, preferred_element_type=jnp.float32)   # (8, T)
    h = jnp.maximum(h + b2_ref[...], 0.0)
    h = jnp.dot(w3_ref[...], h, preferred_element_type=jnp.float32)   # (2, T)
    o_ref[...] = (h + b3_ref[...]).astype(o_ref.dtype)


def student_model_forward(x, edge_index, params):
    """Pallas forward pass of StudentModel.

    x: (N, 5) float32.  edge_index: unused (signature parity).
    params: w1 (16,5), b1 (16,1), w2 (8,16), b2 (8,1), w3 (2,8), b3 (2,1)
            -- torch.nn.Linear's native (out_features, in_features) layout.
    Returns (N, 2) float32.
    """
    del edge_index  # unused in the reference forward pass
    n, f_in = x.shape
    f_out = params["w3"].shape[0]

    # Lane-dense tile over the node axis (multiple of 128 lanes).
    tile_n = min(_MAX_TILE_N, max(128, ((n + 127) // 128) * 128))
    n_pad = ((n + tile_n - 1) // tile_n) * tile_n

    # Transpose so the (large) node dim maps to TPU lanes; pad tail tile.
    xt = jnp.transpose(x)  # (5, N)
    if n_pad != n:
        xt = jnp.pad(xt, ((0, 0), (0, n_pad - n)))

    grid = (n_pad // tile_n,)

    def _pinned(shape):
        # Weights/biases: whole array, same block every iteration (VMEM-resident).
        return pl.BlockSpec(shape, lambda i: (0, 0))

    w1, b1 = params["w1"], params["b1"]
    w2, b2 = params["w2"], params["b2"]
    w3, b3 = params["w3"], params["b3"]

    flops_per_node = 2 * (5 * 16 + 16 * 8 + 8 * 2)  # = 448
    weight_bytes = 4 * (w1.size + b1.size + w2.size + b2.size + w3.size + b3.size)
    cost = pl.CostEstimate(
        flops=flops_per_node * n_pad,
        transcendentals=0,
        bytes_accessed=n_pad * 4 * (f_in + f_out) + weight_bytes,
    )

    out_t = pl.pallas_call(
        _mlp_kernel,
        out_shape=jax.ShapeDtypeStruct((f_out, n_pad), jnp.float32),
        grid=grid,
        in_specs=[
            pl.BlockSpec((f_in, tile_n), lambda i: (0, i)),  # x tile (lane-dense)
            _pinned(w1.shape), _pinned(b1.shape),
            _pinned(w2.shape), _pinned(b2.shape),
            _pinned(w3.shape), _pinned(b3.shape),
        ],
        out_specs=pl.BlockSpec((f_out, tile_n), lambda i: (0, i)),
        compiler_params=pltpu.CompilerParams(
            dimension_semantics=("parallel",),
        ),
        cost_estimate=cost,
    )(xt, w1, b1, w2, b2, w3, b3)

    # Back to the PyTorch-facing (N, 2) layout; drop padded nodes.
    return jnp.transpose(out_t[:, :n])


def init_params(key):
    """Deterministic init mimicking torch.nn.Linear (uniform +-1/sqrt(fan_in)).

    Weights stored as (out_features, in_features), biases as (out_features, 1).
    """
    dims = [(5, 16), (16, 8), (8, 2)]
    params = {}
    for i, (fan_in, fan_out) in enumerate(dims, start=1):
        key, kw, kb = jax.random.split(key, 3)
        bound = 1.0 / jnp.sqrt(float(fan_in))
        params[f"w{i}"] = jax.random.uniform(
            kw, (fan_out, fan_in), jnp.float32, -bound, bound)
        params[f"b{i}"] = jax.random.uniform(
            kb, (fan_out, 1), jnp.float32, -bound, bound)
    return params


if __name__ == "__main__":
    key = jax.random.PRNGKey(0)
    key, kx, ke = jax.random.split(key, 3)

    num_nodes = 8
    x = jax.random.normal(kx, (num_nodes, 5), jnp.float32)
    # edge_index as in typical GNN usage: (2, num_edges) int32 (unused by forward)
    edge_index = jax.random.randint(ke, (2, 16), 0, num_nodes, jnp.int32)

    params = init_params(key)

    out = student_model_forward(x, edge_index, params)
    out = jax.block_until_ready(out)

    # Reference check in plain JAX (weights are (out, in), biases (out, 1)).
    def ref(x, p):
        h = jnp.maximum(x @ p["w1"].T + p["b1"].T, 0.0)
        h = jnp.maximum(h @ p["w2"].T + p["b2"].T, 0.0)
        return h @ p["w3"].T + p["b3"].T

    expected = ref(x, params)
    assert out.shape == (num_nodes, 2)
    assert jnp.allclose(out, expected, atol=1e-5, rtol=1e-5)
    print("KERNEL_OK")
</pallas_src>

<mosaic_0001>
module attributes {stable_mosaic.version = 11 : i64} {
  func.func @_mlp_kernel(%arg0: i32, %arg1: memref<5x128xf32, #tpu.memory_space<vmem>>, %arg2: memref<16x5xf32, #tpu.memory_space<vmem>>, %arg3: memref<16x1xf32, #tpu.memory_space<vmem>>, %arg4: memref<8x16xf32, #tpu.memory_space<vmem>>, %arg5: memref<8x1xf32, #tpu.memory_space<vmem>>, %arg6: memref<2x8xf32, #tpu.memory_space<vmem>>, %arg7: memref<2x1xf32, #tpu.memory_space<vmem>>, %arg8: memref<2x128xf32, #tpu.memory_space<vmem>>) attributes {dimension_semantics = [#tpu.dimension_semantics<parallel>], iteration_bounds = array<i64: 1>, scalar_prefetch = 0 : i64, scratch_operands = 0 : i64, tpu.core_type = #tpu.core_type<tc>, window_params = [{transform_indices = @transform_0, window_bounds = array<i64: 5, 128>}, {pipeline_mode = #tpu.pipeline_mode<synchronous>, transform_indices = @transform_1, window_bounds = array<i64: 16, 5>}, {pipeline_mode = #tpu.pipeline_mode<synchronous>, transform_indices = @transform_2, window_bounds = array<i64: 16, 1>}, {pipeline_mode = #tpu.pipeline_mode<synchronous>, transform_indices = @transform_3, window_bounds = array<i64: 8, 16>}, {pipeline_mode = #tpu.pipeline_mode<synchronous>, transform_indices = @transform_4, window_bounds = array<i64: 8, 1>}, {pipeline_mode = #tpu.pipeline_mode<synchronous>, transform_indices = @transform_5, window_bounds = array<i64: 2, 8>}, {pipeline_mode = #tpu.pipeline_mode<synchronous>, transform_indices = @transform_6, window_bounds = array<i64: 2, 1>}, {transform_indices = @transform_7, window_bounds = array<i64: 2, 128>}]} {
    %c0 = arith.constant 0 : index
    %c0_0 = arith.constant 0 : index
    %0 = vector.load %arg1[%c0, %c0_0] : memref<5x128xf32, #tpu.memory_space<vmem>>, vector<5x128xf32>
    %c0_1 = arith.constant 0 : index
    %c0_2 = arith.constant 0 : index
    %1 = vector.load %arg2[%c0_1, %c0_2] : memref<16x5xf32, #tpu.memory_space<vmem>>, vector<16x5xf32>
    %cst = arith.constant dense<0.000000e+00> : vector<16x128xf32>
    %2 = tpu.matmul %1, %0, %cst {dimension_numbers = #tpu.dot_dimension_numbers<[1], [0], [0], [1], [0, 0, 1, 1], [], []>} : vector<16x5xf32>, vector<5x128xf32>, vector<16x128xf32> -> vector<16x128xf32>
    %c0_3 = arith.constant 0 : index
    %c0_4 = arith.constant 0 : index
    %3 = vector.load %arg3[%c0_3, %c0_4] : memref<16x1xf32, #tpu.memory_space<vmem>>, vector<16x1xf32>
    %4 = vector.broadcast %3 : vector<16x1xf32> to vector<16x128xf32>
    %5 = arith.addf %2, %4 : vector<16x128xf32>
    %cst_5 = arith.constant 0.000000e+00 : f32
    %6 = vector.broadcast %cst_5 : f32 to vector<16x128xf32>
    %7 = arith.maximumf %5, %6 : vector<16x128xf32>
    %c0_6 = arith.constant 0 : index
    %c0_7 = arith.constant 0 : index
    %8 = vector.load %arg4[%c0_6, %c0_7] : memref<8x16xf32, #tpu.memory_space<vmem>>, vector<8x16xf32>
    %cst_8 = arith.constant dense<0.000000e+00> : vector<8x128xf32>
    %9 = tpu.matmul %8, %7, %cst_8 {dimension_numbers = #tpu.dot_dimension_numbers<[1], [0], [0], [1], [0, 0, 1, 1], [], []>} : vector<8x16xf32>, vector<16x128xf32>, vector<8x128xf32> -> vector<8x128xf32>
    %c0_9 = arith.constant 0 : index
    %c0_10 = arith.constant 0 : index
    %10 = vector.load %arg5[%c0_9, %c0_10] : memref<8x1xf32, #tpu.memory_space<vmem>>, vector<8x1xf32>
    %11 = vector.broadcast %10 : vector<8x1xf32> to vector<8x128xf32>
    %12 = arith.addf %9, %11 : vector<8x128xf32>
    %cst_11 = arith.constant 0.000000e+00 : f32
    %13 = vector.broadcast %cst_11 : f32 to vector<8x128xf32>
    %14 = arith.maximumf %12, %13 : vector<8x128xf32>
    %c0_12 = arith.constant 0 : index
    %c0_13 = arith.constant 0 : index
    %15 = vector.load %arg6[%c0_12, %c0_13] : memref<2x8xf32, #tpu.memory_space<vmem>>, vector<2x8xf32>
    %cst_14 = arith.constant dense<0.000000e+00> : vector<2x128xf32>
    %16 = tpu.matmul %15, %14, %cst_14 {dimension_numbers = #tpu.dot_dimension_numbers<[1], [0], [0], [1], [0, 0, 1, 1], [], []>} : vector<2x8xf32>, vector<8x128xf32>, vector<2x128xf32> -> vector<2x128xf32>
    %c0_15 = arith.constant 0 : index
    %c0_16 = arith.constant 0 : index
    %17 = vector.load %arg7[%c0_15, %c0_16] : memref<2x1xf32, #tpu.memory_space<vmem>>, vector<2x1xf32>
    %18 = vector.broadcast %17 : vector<2x1xf32> to vector<2x128xf32>
    %19 = arith.addf %16, %18 : vector<2x128xf32>
    %c0_17 = arith.constant 0 : index
    %c0_18 = arith.constant 0 : index
    %20 = vector.load %arg8[%c0_17, %c0_18] : memref<2x128xf32, #tpu.memory_space<vmem>>, vector<2x128xf32>
    tpu.vector_store %arg8[%c0_17, %c0_18], %19 {strides = array<i32>} : memref<2x128xf32, #tpu.memory_space<vmem>>, vector<2x128xf32>,
    return
  }
  func.func @transform_0(%arg0: i32) -> (i32, i32) {
    %c0_i32 = arith.constant 0 : i32
    %c0_i32_0 = arith.constant 0 : i32
    return %c0_i32, %arg0 : i32, i32
  }
  func.func @transform_1(%arg0: i32) -> (i32, i32) {
    %c0_i32 = arith.constant 0 : i32
    %c0_i32_0 = arith.constant 0 : i32
    %c0_i32_1 = arith.constant 0 : i32
    return %c0_i32, %c0_i32_0 : i32, i32
  }
  func.func @transform_2(%arg0: i32) -> (i32, i32) {
    %c0_i32 = arith.constant 0 : i32
    %c0_i32_0 = arith.constant 0 : i32
    %c0_i32_1 = arith.constant 0 : i32
    return %c0_i32, %c0_i32_0 : i32, i32
  }
  func.func @transform_3(%arg0: i32) -> (i32, i32) {
    %c0_i32 = arith.constant 0 : i32
    %c0_i32_0 = arith.constant 0 : i32
    %c0_i32_1 = arith.constant 0 : i32
    return %c0_i32, %c0_i32_0 : i32, i32
  }
  func.func @transform_4(%arg0: i32) -> (i32, i32) {
    %c0_i32 = arith.constant 0 : i32
    %c0_i32_0 = arith.constant 0 : i32
    %c0_i32_1 = arith.constant 0 : i32
    return %c0_i32, %c0_i32_0 : i32, i32
  }
  func.func @transform_5(%arg0: i32) -> (i32, i32) {
    %c0_i32 = arith.constant 0 : i32
    %c0_i32_0 = arith.constant 0 : i32
    %c0_i32_1 = arith.constant 0 : i32
    return %c0_i32, %c0_i32_0 : i32, i32
  }
  func.func @transform_6(%arg0: i32) -> (i32, i32) {
    %c0_i32 = arith.constant 0 : i32
    %c0_i32_0 = arith.constant 0 : i32
    %c0_i32_1 = arith.constant 0 : i32
    return %c0_i32, %c0_i32_0 : i32, i32
  }
  func.func @transform_7(%arg0: i32) -> (i32, i32) {
    %c0_i32 = arith.constant 0 : i32
    %c0_i32_0 = arith.constant 0 : i32
    return %c0_i32, %arg0 : i32, i32
  }
}

</mosaic_0001>

<llo_original>
// kernel: tpu_custom_call.1
$region0: #{tpu_custom_call.1}
  #allocation0 [shape = 'u32[]', space=smem, size = 0x4, offset = 0x4, fixed_abs, tag = 'smem constant byte address 0x4 - core index']
  #allocation1 [shape = 'u32[144,128]{1,0:T(1,128)}', space=vmem, size = 0x12000, scoped, tag = 'internal scratch']
  %s0 = inlined_call_operand.vmem [shape: f32[5,128], index: 0, kind: input, shape index: {}]
  %s1 = inlined_call_operand.vmem [shape: f32[16,5], index: 1, kind: input, shape index: {}]
  %s2 = inlined_call_operand.vmem [shape: f32[16,1], index: 2, kind: input, shape index: {}]
  %s3 = inlined_call_operand.vmem [shape: f32[8,16], index: 3, kind: input, shape index: {}]
  %s4 = inlined_call_operand.vmem [shape: f32[8,1], index: 4, kind: input, shape index: {}]
  %s5 = inlined_call_operand.vmem [shape: f32[2,8], index: 5, kind: input, shape index: {}]
  %s6 = inlined_call_operand.vmem [shape: f32[2,1], index: 6, kind: input, shape index: {}]
  %s7 = inlined_call_operand.hbm [shape: f32[2,128], index: 7, kind: output, shape index: {}]
  %s8 = sld [smem:[#allocation0]]
  $region38: #{tpu_custom_call.1} parent=0
    _
  %s10 = ssub.s32 1, %s8
  %s11 = scalar_select 0, %s10, %s8
  $region1: #{tpu_custom_call.1} parent=0
    #allocation2 [shape = 'u8[1024]{0}', space=vmem, size = 0x400, scoped, tag = 'output window, operand 0, single buffered']
    #allocation3 [shape = 's32[1]{0}', space=sflag, size = 0x4, scoped, tag = 'scoped memory for tpu_custom_call.1']
    %12 = vsyncpa [#allocation3], 0
    // Predicated region
    $region2: #{tpu_custom_call.1} parent=1 // pred_check
      _
    $region3: #{tpu_custom_call.1} parent=1 // pred_check_branch
      %14 = sbr.rel (0) target = $region5
    $region4: #{tpu_custom_call.1} parent=1 // pred_region
      _
    $region5: #{tpu_custom_call.1} parent=1 // pred_fallthru
      _
    // Predicated region
    $region6: #{tpu_custom_call.1} parent=1 // pred_check
      _
    $region7: #{tpu_custom_call.1} parent=1 // pred_check_branch
      %16 = sbr.rel (0) target = $region9
    $region8: #{tpu_custom_call.1} parent=1 // pred_region
      _
    $region9: #{tpu_custom_call.1} parent=1 // pred_fallthru
      _
    // Predicated region
    $region10: #{tpu_custom_call.1} parent=1 // pred_check
      _
    $region11: #{tpu_custom_call.1} parent=1 // pred_check_branch
      %18 = sbr.rel (0) target = $region13
    $region12: #{tpu_custom_call.1} parent=1 // pred_region
      _
    $region13: #{tpu_custom_call.1} parent=1 // pred_fallthru
      _
    // Predicated region
    $region14: #{tpu_custom_call.1} parent=1 // pred_check
      _
    $region15: #{tpu_custom_call.1} parent=1 // pred_check_branch
      %20 = sbr.rel (0) target = $region17
    $region16: #{tpu_custom_call.1} parent=1 // pred_region
      _
    $region17: #{tpu_custom_call.1} parent=1 // pred_fallthru
      _
    // Predicated region
    $region18: #{tpu_custom_call.1} parent=1 // pred_check
      _
    $region19: #{tpu_custom_call.1} parent=1 // pred_check_branch
      %22 = sbr.rel (0) target = $region21
    $region20: #{tpu_custom_call.1} parent=1 // pred_region
      _
    $region21: #{tpu_custom_call.1} parent=1 // pred_fallthru
      _
    // Predicated region
    $region22: #{tpu_custom_call.1} parent=1 // pred_check
      _
    $region23: #{tpu_custom_call.1} parent=1 // pred_check_branch
      %24 = sbr.rel (0) target = $region25
    $region24: #{tpu_custom_call.1} parent=1 // pred_region
      _
    $region25: #{tpu_custom_call.1} parent=1 // pred_fallthru
      _
    // Predicated region
    $region26: #{tpu_custom_call.1} parent=1 // pred_check
      _
    $region27: #{tpu_custom_call.1} parent=1 // pred_check_branch
      %26 = sbr.rel (0) target = $region29
    $region28: #{tpu_custom_call.1} parent=1 // pred_region
      _
    $region29: #{tpu_custom_call.1} parent=1 // pred_fallthru
      _
    %v27 = vld [vmem:[%s0] sm:$0x1f]
    %v28 = vld [vmem:[%s1] sm:$0xff]
    %v29 = vld [vmem:[%s1 + $0x8] sm:$0xff]
    %v30 = vld [vmem:[%s2] sm:$0xff]
    %v31 = vld [vmem:[%s2 + $0x8] sm:$0xff]
    %33 = vset.pattern.permute.xlu0 0
    %34 = vperm.xlu0 %33, %v30
    %v35 = vpop.permute.xlu0 %34
    %38 = vset.pattern.permute.xlu0 0
    %39 = vperm.xlu0 %38, %v31
    %v40 = vpop.permute.xlu0 %39
    %vm42 = vcmask 39936
    %v44 = vsel %vm42, %v28, 0
    %v47 = vsel %vm42, %v29, 0
    %vm49 = vcmask 1044480
    %v51 = vsel %vm49, %v27, 0
    %53 = vmatprep.subr.mxu0 0.0
    %54 = vmatpush1.msra.mxu0 0.0
    %55 = vmatprep.subr.mxu0 0.0
    %56 = vmatpush1.msra.mxu0 0.0
    %57 = vmatprep.subr.mxu0 0.0
    %58 = vmatpush1.msra.mxu0 0.0
    %59 = vmatprep.subr.mxu0 0.0
    %60 = vmatpush1.msra.mxu0 0.0
    %61 = vmatprep.subr.mxu0 0.0
    %62 = vmatpush1.msra.mxu0 0.0
    %63 = vmatprep.subr.mxu0 0.0
    %64 = vmatpush1.msra.mxu0 0.0
    %65 = vmatprep.subr.mxu0 0.0
    %66 = vmatpush1.msra.mxu0 0.0
    %67 = vmatprep.subr.mxu0 0.0
    %68 = vmatpush1.msra.mxu0 0.0
    %69 = vmatprep.subr.mxu0 0.0
    %70 = vmatpush1.msra.mxu0 0.0
    %71 = vmatprep.subr.mxu0 0.0
    %72 = vmatpush1.msra.mxu0 0.0
    %73 = vmatprep.subr.mxu0 0.0
    %74 = vmatpush1.msra.mxu0 0.0
    %75 = vmatprep.subr.mxu0 0.0
    %76 = vmatpush1.msra.mxu0 0.0
    %77 = vmatprep.subr.mxu0 0.0
    %78 = vmatpush1.msra.mxu0 0.0
    %79 = vmatprep.subr.mxu0 0.0
    %80 = vmatpush1.msra.mxu0 0.0
    %81 = vmatprep.subr.mxu0 0.0
    %82 = vmatpush1.msra.mxu0 0.0
    %83 = vmatprep.subr.mxu0 0.0
    %84 = vmatpush1.msra.mxu0 %v51
    %85 = vmatprep.subr.mxu0 0.0
    %86 = vmatpush2.msra.mxu0 0.0
    %87 = vmatprep.subr.mxu0 0.0
    %88 = vmatpush2.msra.mxu0 0.0
    %89 = vmatprep.subr.mxu0 0.0
    %90 = vmatpush2.msra.mxu0 0.0
    %91 = vmatprep.subr.mxu0 0.0
    %92 = vmatpush2.msra.mxu0 0.0
    %93 = vmatprep.subr.mxu0 0.0
    %94 = vmatpush2.msra.mxu0 0.0
    %95 = vmatprep.subr.mxu0 0.0
    %96 = vmatpush2.msra.mxu0 0.0
    %97 = vmatprep.subr.mxu0 0.0
    %98 = vmatpush2.msra.mxu0 0.0
    %99 = vmatprep.subr.mxu0 0.0
    %100 = vmatpush2.msra.mxu0 0.0
    %101 = vmatprep.subr.mxu0 0.0
    %102 = vmatpush2.msra.mxu0 0.0
    %103 = vmatprep.subr.mxu0 0.0
    %104 = vmatpush2.msra.mxu0 0.0
    %105 = vmatprep.subr.mxu0 0.0
    %106 = vmatpush2.msra.mxu0 0.0
    %107 = vmatprep.subr.mxu0 0.0
    %108 = vmatpush2.msra.mxu0 0.0
    %109 = vmatprep.subr.mxu0 0.0
    %110 = vmatpush2.msra.mxu0 0.0
    %111 = vmatprep.subr.mxu0 0.0
    %112 = vmatpush2.msra.mxu0 0.0
    %113 = vmatprep.subr.mxu0 0.0
    %114 = vmatpush2.msra.mxu0 0.0
    %115 = vmatprep.subr.mxu0 0.0
    %116 = vmatpush2.msra.mxu0 0.0
    %117 = vmatprep.mubr.f32.mxu0 0.0
    %118 = vmatmul.mubr.f32.gmra.mxu0 %v44
    %v119 = vpop.f32.mrf.mxu0
    %v120 = vadd.f32 %v35, %v119
    %v121 = vpop.f32.mrf.mxu0
    %122 = vmatprep.mubr.f32.mxu0 0.0
    %123 = vmatmul.mubr.f32.gmra.mxu0 %v47
    %v124 = vpop.f32.mrf.mxu0
    %v125 = vadd.f32 %v40, %v124
    %v126 = vpop.f32.mrf.mxu0
    %127 = vdwg.mxu0
    %v128 = vmax.f32 %v120, 0.0
    %v129 = vmax.f32 %v125, 0.0
    %v130 = vld [vmem:[%s3] sm:$0xff]
    %v131 = vld [vmem:[%s4] sm:$0xff]
    %133 = vset.pattern.permute.xlu0 0
    %134 = vperm.xlu0 %133, %v131
    %v135 = vpop.permute.xlu0 %134
    %vm137 = vcmask 130048
    %v139 = vsel %vm137, %v130, 0
    %141 = vmatprep.subr.mxu0 0.0
    %142 = vmatpush1.msra.mxu0 0.0
    %143 = vmatprep.subr.mxu0 0.0
    %144 = vmatpush1.msra.mxu0 0.0
    %145 = vmatprep.subr.mxu0 0.0
    %146 = vmatpush1.msra.mxu0 0.0
    %147 = vmatprep.subr.mxu0 0.0
    %148 = vmatpush1.msra.mxu0 0.0
    %149 = vmatprep.subr.mxu0 0.0
    %150 = vmatpush1.msra.mxu0 0.0
    %151 = vmatprep.subr.mxu0 0.0
    %152 = vmatpush1.msra.mxu0 0.0
    %153 = vmatprep.subr.mxu0 0.0
    %154 = vmatpush1.msra.mxu0 0.0
    %155 = vmatprep.subr.mxu0 0.0
    %156 = vmatpush1.msra.mxu0 0.0
    %157 = vmatprep.subr.mxu0 0.0
    %158 = vmatpush1.msra.mxu0 0.0
    %159 = vmatprep.subr.mxu0 0.0
    %160 = vmatpush1.msra.mxu0 0.0
    %161 = vmatprep.subr.mxu0 0.0
    %162 = vmatpush1.msra.mxu0 0.0
    %163 = vmatprep.subr.mxu0 0.0
    %164 = vmatpush1.msra.mxu0 0.0
    %165 = vmatprep.subr.mxu0 0.0
    %166 = vmatpush1.msra.mxu0 0.0
    %167 = vmatprep.subr.mxu0 0.0
    %168 = vmatpush1.msra.mxu0 0.0
    %169 = vmatprep.subr.mxu0 0.0
    %170 = vmatpush1.msra.mxu0 %v129
    %171 = vmatprep.subr.mxu0 0.0
    %172 = vmatpush1.msra.mxu0 %v128
    %173 = vmatprep.subr.mxu0 0.0
    %174 = vmatpush2.msra.mxu0 0.0
    %175 = vmatprep.subr.mxu0 0.0
    %176 = vmatpush2.msra.mxu0 0.0
    %177 = vmatprep.subr.mxu0 0.0
    %178 = vmatpush2.msra.mxu0 0.0
    %179 = vmatprep.subr.mxu0 0.0
    %180 = vmatpush2.msra.mxu0 0.0
    %181 = vmatprep.subr.mxu0 0.0
    %182 = vmatpush2.msra.mxu0 0.0
    %183 = vmatprep.subr.mxu0 0.0
    %184 = vmatpush2.msra.mxu0 0.0
    %185 = vmatprep.subr.mxu0 0.0
    %186 = vmatpush2.msra.mxu0 0.0
    %187 = vmatprep.subr.mxu0 0.0
    %188 = vmatpush2.msra.mxu0 0.0
    %189 = vmatprep.subr.mxu0 0.0
    %190 = vmatpush2.msra.mxu0 0.0
    %191 = vmatprep.subr.mxu0 0.0
    %192 = vmatpush2.msra.mxu0 0.0
    %193 = vmatprep.subr.mxu0 0.0
    %194 = vmatpush2.msra.mxu0 0.0
    %195 = vmatprep.subr.mxu0 0.0
    %196 = vmatpush2.msra.mxu0 0.0
    %197 = vmatprep.subr.mxu0 0.0
    %198 = vmatpush2.msra.mxu0 0.0
    %199 = vmatprep.subr.mxu0 0.0
    %200 = vmatpush2.msra.mxu0 0.0
    %201 = vmatprep.subr.mxu0 0.0
    %202 = vmatpush2.msra.mxu0 0.0
    %203 = vmatprep.subr.mxu0 0.0
    %204 = vmatpush2.msra.mxu0 0.0
    %205 = vmatprep.mubr.f32.mxu0 0.0
    %206 = vmatmul.mubr.f32.gmra.mxu0 %v139
    %v207 = vpop.f32.mrf.mxu0
    %v208 = vadd.f32 %v135, %v207
    %v209 = vpop.f32.mrf.mxu0
    %210 = vdwg.mxu0
    %v211 = vmax.f32 %v208, 0.0
    %v212 = vld [vmem:[%s5] sm:$0x3]
    %v213 = vld [vmem:[%s6] sm:$0x3]
    %215 = vset.pattern.permute.xlu0 0
    %216 = vperm.xlu0 %215, %v213
    %v217 = vpop.permute.xlu0 %216
    %vm219 = vcmask 64512
    %v221 = vsel %vm219, %v212, 0
    %223 = vmatprep.subr.mxu0 0.0
    %224 = vmatpush1.msra.mxu0 0.0
    %225 = vmatprep.subr.mxu0 0.0
    %226 = vmatpush1.msra.mxu0 0.0
    %227 = vmatprep.subr.mxu0 0.0
    %228 = vmatpush1.msra.mxu0 0.0
    %229 = vmatprep.subr.mxu0 0.0
    %230 = vmatpush1.msra.mxu0 0.0
    %231 = vmatprep.subr.mxu0 0.0
    %232 = vmatpush1.msra.mxu0 0.0
    %233 = vmatprep.subr.mxu0 0.0
    %234 = vmatpush1.msra.mxu0 0.0
    %235 = vmatprep.subr.mxu0 0.0
    %236 = vmatpush1.msra.mxu0 0.0
    %237 = vmatprep.subr.mxu0 0.0
    %238 = vmatpush1.msra.mxu0 0.0
    %239 = vmatprep.subr.mxu0 0.0
    %240 = vmatpush1.msra.mxu0 0.0
    %241 = vmatprep.subr.mxu0 0.0
    %242 = vmatpush1.msra.mxu0 0.0
    %243 = vmatprep.subr.mxu0 0.0
    %244 = vmatpush1.msra.mxu0 0.0
    %245 = vmatprep.subr.mxu0 0.0
    %246 = vmatpush1.msra.mxu0 0.0
    %247 = vmatprep.subr.mxu0 0.0
    %248 = vmatpush1.msra.mxu0 0.0
    %249 = vmatprep.subr.mxu0 0.0
    %250 = vmatpush1.msra.mxu0 0.0
    %251 = vmatprep.subr.mxu0 0.0
    %252 = vmatpush1.msra.mxu0 0.0
    %253 = vmatprep.subr.mxu0 0.0
    %254 = vmatpush1.msra.mxu0 %v211
    %255 = vmatprep.subr.mxu0 0.0
    %256 = vmatpush2.msra.mxu0 0.0
    %257 = vmatprep.subr.mxu0 0.0
    %258 = vmatpush2.msra.mxu0 0.0
    %259 = vmatprep.subr.mxu0 0.0
    %260 = vmatpush2.msra.mxu0 0.0
    %261 = vmatprep.subr.mxu0 0.0
    %262 = vmatpush2.msra.mxu0 0.0
    %263 = vmatprep.subr.mxu0 0.0
    %264 = vmatpush2.msra.mxu0 0.0
    %265 = vmatprep.subr.mxu0 0.0
    %266 = vmatpush2.msra.mxu0 0.0
    %267 = vmatprep.subr.mxu0 0.0
    %268 = vmatpush2.msra.mxu0 0.0
    %269 = vmatprep.subr.mxu0 0.0
    %270 = vmatpush2.msra.mxu0 0.0
    %271 = vmatprep.subr.mxu0 0.0
    %272 = vmatpush2.msra.mxu0 0.0
    %273 = vmatprep.subr.mxu0 0.0
    %274 = vmatpush2.msra.mxu0 0.0
    %275 = vmatprep.subr.mxu0 0.0
    %276 = vmatpush2.msra.mxu0 0.0
    %277 = vmatprep.subr.mxu0 0.0
    %278 = vmatpush2.msra.mxu0 0.0
    %279 = vmatprep.subr.mxu0 0.0
    %280 = vmatpush2.msra.mxu0 0.0
    %281 = vmatprep.subr.mxu0 0.0
    %282 = vmatpush2.msra.mxu0 0.0
    %283 = vmatprep.subr.mxu0 0.0
    %284 = vmatpush2.msra.mxu0 0.0
    %285 = vmatprep.subr.mxu0 0.0
    %286 = vmatpush2.msra.mxu0 0.0
    %287 = vmatprep.mubr.f32.mxu0 0.0
    %288 = vmatmul.mubr.f32.gmra.mxu0 %v221
    %v289 = vpop.f32.mrf.mxu0
    %v290 = vadd.f32 %v217, %v289
    %v291 = vpop.f32.mrf.mxu0
    %292 = vdwg.mxu0
    %293 = vst [vmem:[#allocation2] sm:$0x3] %v290
    // Predicated region
    $region30: #{tpu_custom_call.1} parent=1 // pred_check
      _
    $region31: #{tpu_custom_call.1} parent=1 // pred_check_branch
      %295 = sbr.rel (0) target = $region33
    $region32: #{tpu_custom_call.1} parent=1 // pred_region
      %s297 = ssub.s32 32, 32
      %298 = vsyncadd [#allocation3], %s297
      %s300 = sshll.u32 [#allocation2], 4
      %s301 = int_to_ptr.vmem [resolvable:$true] %s300
      %303 = dma.vmem_to_hbm [thread:$0]  %s301, 32, %s7, [#allocation3]
    $region33: #{tpu_custom_call.1} parent=1 // pred_fallthru
      _
    // Predicated region
    $region34: #{tpu_custom_call.1} parent=1 // pred_check
      _
    $region35: #{tpu_custom_call.1} parent=1 // pred_check_branch
      %305 = sbr.rel (0) target = $region37
    $region36: #{tpu_custom_call.1} parent=1 // pred_region
      %306 = dma.done [#allocation3], 32
    $region37: #{tpu_custom_call.1} parent=1 // pred_fallthru
      _
    %307 = vsyncpa [#allocation3], 1

</llo_original>
